<compile_context>
chip_gen: v7x
topology: tpu7x:2x2x1
jax: 0.10.0
libtpu: 0.0.40
codegen_flags: <defaults>
</compile_context>

<pallas_src>
import functools

import jax
import jax.numpy as jnp
import numpy as np
from jax import lax
from jax.experimental import pallas as pl
from jax.experimental.pallas import tpu as pltpu


# ----------------------------------------------------------------------------
# Pallas kernel: fused bidirectional LSTM + epilogue adaptive-avg pooling
# ----------------------------------------------------------------------------
def _lstm_fused_kernel(x_ref, wih_ref, whh_ref, b_ref, pw_ref,
                       out_ref, pre_ref):
    """Fused bidirectional LSTM over the full sequence + pooled epilogue.

    x_ref:   (S*B, 2I) bf16  row t*B+b = [x[b,t,:] | x[b,S-1-t,:]]
    wih_ref: (2I, 8H)  bf16  block-diag input->gate weights, reordered columns
    whh_ref: (2H, 8H)  bf16  block-diag hidden->gate weights, reordered columns
    b_ref:   (1, 8H)   f32   combined bias (b_ih + b_hh), reordered columns
    pw_ref:  (S*2H, 2H) bf16 pooling matrix (rows follow hs_cat lane order)
    out_ref: (B, 4H)   f32   [pooled | h_final]  (single lane-dense store)
    pre_ref: (S*B, 8H) f32   VMEM scratch: hoisted input projection
    Gate column order (blocks of width H): [i_f i_b f_f f_b o_f o_b g_f g_b].
    """
    B = out_ref.shape[0]
    DH = out_ref.shape[1] // 2          # 2H
    S = x_ref.shape[0] // B

    # ---- prologue: hoisted input projection, one bf16 MXU pass, staged ----
    pre_ref[...] = (
        jnp.dot(x_ref[...], wih_ref[...], preferred_element_type=jnp.float32)
        + b_ref[...])                                        # (S*B, 8H) f32

    h = jnp.zeros((B, DH), jnp.float32)                      # [h_fwd | h_bwd]
    c = jnp.zeros((B, DH), jnp.float32)
    hs = []

    # Fully unrolled serial recurrence (S static & small); one bf16 MXU pass
    # per step is the only MXU work on the serial chain.
    # TODO(synk): on v6e/v7x keep whh resident in the MXU via
    #             pltpu.matmul_push_rhs / matmul_acc_lhs; kept on jnp.dot
    #             (bf16 single pass) for portability.
    for i in range(S):
        gates = pre_ref[i * B:(i + 1) * B, :] + jnp.dot(
            h.astype(jnp.bfloat16), whh_ref[...],
            preferred_element_type=jnp.float32)              # (B, 8H) f32
        sig = jax.nn.sigmoid(gates)        # full-vreg sigmoid (g cols unused)
        i_g = sig[:, 0 * DH:1 * DH]        # [i_f | i_b]
        f_g = sig[:, 1 * DH:2 * DH]        # [f_f | f_b]
        o_g = sig[:, 2 * DH:3 * DH]        # [o_f | o_b]
        g_g = jnp.tanh(gates[:, 3 * DH:4 * DH])              # [g_f | g_b]
        c = f_g * c + i_g * g_g
        h = o_g * jnp.tanh(c)
        hs.append(h)

    # ---- epilogue: ONE pooling matmul, off the serial chain ----
    hs_cat = jnp.concatenate(hs, axis=-1).astype(jnp.bfloat16)   # (B, S*2H)
    pooled = jnp.dot(hs_cat, pw_ref[...],
                     preferred_element_type=jnp.float32)         # (B, 2H)

    # Single 128-lane-exact store: [pooled | h_final]; split in the wrapper.
    out_ref[...] = jnp.concatenate([pooled, h], axis=-1)


# ----------------------------------------------------------------------------
# One-time parameter preparation (NOT inside the jitted forward)
# ----------------------------------------------------------------------------
def _split_gates(w, H):
    """Split last axis (PyTorch gate order [i|f|g|o]) into the four blocks."""
    return (w[..., 0:H], w[..., H:2 * H], w[..., 2 * H:3 * H],
            w[..., 3 * H:4 * H])


def _fuse_dir_weights(w_f, w_b, H):
    """Block-diagonal fuse of per-direction (K, 4H) weights into (2K, 8H)
    with gate-column order [i_f i_b f_f f_b o_f o_b g_f g_b]."""
    K = w_f.shape[0]
    i_f, f_f, g_f, o_f = _split_gates(w_f, H)
    i_b, f_b, g_b, o_b = _split_gates(w_b, H)
    z = jnp.zeros((K, H), jnp.float32)
    top = jnp.concatenate([i_f, z, f_f, z, o_f, z, g_f, z], axis=1)
    bot = jnp.concatenate([z, i_b, z, f_b, z, o_b, z, g_b], axis=1)
    return jnp.concatenate([top, bot], axis=0)


def _fuse_bias(bc_f, bc_b, H):
    i_f, f_f, g_f, o_f = _split_gates(bc_f, H)
    i_b, f_b, g_b, o_b = _split_gates(bc_b, H)
    return jnp.concatenate([i_f, i_b, f_f, f_b, o_f, o_b, g_f, g_b])


def _pool_weights(S, H):
    """Pooling matrices pw[i] (2H, 2H): contribution of iteration-i hidden
    state hs[i] = [h_fwd(t=i) | h_bwd(t=S-1-i)] to the pooled output.

    NOTE (intentional): PyTorch's forward does out.view(batch, 2H, seq) — a
    raw row-major REINTERPRETATION (not a transpose) that mixes timesteps and
    features — then AdaptiveAvgPool1d(1).  pooled[b, j] is the mean of the S
    consecutive flat elements j*S .. j*S+S-1 of out[b] (flat index t*2H + c).
    We encode exactly that mapping; do NOT "fix" it to a per-feature mean.
    """
    DH = 2 * H
    M = np.zeros((S, DH, DH), np.float32)       # M[t]: out[:,t,:] -> pooled
    for t in range(S):
        for ci in range(DH):
            M[t, ci, (t * DH + ci) // S] = 1.0 / S
    pw = np.zeros((S, DH, DH), np.float32)
    for i in range(S):
        pw[i, :H, :] = M[i, :H, :]              # forward half is time i
        pw[i, H:, :] = M[S - 1 - i, H:, :]      # backward half is time S-1-i
    return jnp.asarray(pw)


def prepare_lstm_params(params, *, hidden, seq_len):
    """Fuse/reorder the PyTorch LSTM weights once at init time."""
    H = hidden
    S = seq_len
    f32 = lambda a: jnp.asarray(a, jnp.float32)
    wih = _fuse_dir_weights(f32(params["wih_f"]).T, f32(params["wih_b"]).T, H)
    whh = _fuse_dir_weights(f32(params["whh_f"]).T, f32(params["whh_b"]).T, H)
    b = _fuse_bias(f32(params["bih_f"]) + f32(params["bhh_f"]),
                   f32(params["bih_b"]) + f32(params["bhh_b"]), H)
    pw = _pool_weights(S, H).reshape(S * 2 * H, 2 * H)   # rows = hs_cat lanes
    return {
        "wih": wih.astype(jnp.bfloat16),                 # (2I, 8H)
        "whh": whh.astype(jnp.bfloat16),                 # (2H, 8H)
        "b": b.reshape(1, 8 * H).astype(jnp.float32),    # (1, 8H)
        "pw": pw.astype(jnp.bfloat16),                   # (S*2H, 2H)
    }


# ----------------------------------------------------------------------------
# Wrapper (jitted forward)
# ----------------------------------------------------------------------------
_VMEM = pl.BlockSpec(memory_space=pltpu.MemorySpace.VMEM)


@functools.partial(jax.jit, static_argnames=("hidden", "pool"))
def lstm_rnn_forward(x, fused, *, hidden, pool=True):
    """Full LSTM_rnn.forward.  x: (B, S, I) batch_first; `fused` from
    prepare_lstm_params.  Returns (B, 2H) if pool else (2, B*H)."""
    B, S, I = x.shape
    H = hidden
    DH = 2 * H

    # time-major forward input and its time-reverse, fused on the feature axis
    x_tm = jnp.transpose(x, (1, 0, 2))                            # (S, B, I)
    x_fused = jnp.concatenate([x_tm, x_tm[::-1]], axis=-1)        # (S, B, 2I)
    x_fused = x_fused.reshape(S * B, 2 * I).astype(jnp.bfloat16)

    out = pl.pallas_call(
        _lstm_fused_kernel,
        out_shape=jax.ShapeDtypeStruct((B, 4 * H), jnp.float32),
        in_specs=[_VMEM] * 5,
        out_specs=_VMEM,
        scratch_shapes=[pltpu.VMEM((S * B, 8 * H), jnp.float32)],
    )(x_fused, fused["wih"], fused["whh"], fused["b"], fused["pw"])

    if pool:
        return out[:, :DH]                  # AdaptiveAvgPool1d(1) + Flatten
    # out = hn; Flatten(1,-1) on (num_layers*D, B, H) -> (num_layers*D, B*H)
    h_fwd = out[:, DH:DH + H]
    h_bwd = out[:, DH + H:]
    return jnp.stack([h_fwd, h_bwd], axis=0).reshape(2, -1)

    # TODO(synk): if B grows (>8) on v7x, add a batch grid axis with
    # dimension_semantics=("parallel",) to use both TensorCores.


# ----------------------------------------------------------------------------
# Pure-JAX f32 reference (mirrors torch.nn.LSTM math) for a sanity check
# ----------------------------------------------------------------------------
def _ref_lstm_direction(x, wih, whh, b_ih, b_hh, reverse):
    B, S, I = x.shape
    H = whh.shape[1]
    xs = jnp.flip(x, axis=1) if reverse else x

    def step(carry, x_t):
        h, c = carry
        gates = x_t @ wih.T + h @ whh.T + b_ih + b_hh
        i = jax.nn.sigmoid(gates[:, 0 * H:1 * H])
        f = jax.nn.sigmoid(gates[:, 1 * H:2 * H])
        g = jnp.tanh(gates[:, 2 * H:3 * H])
        o = jax.nn.sigmoid(gates[:, 3 * H:4 * H])
        c = f * c + i * g
        h = o * jnp.tanh(c)
        return (h, c), h

    init = (jnp.zeros((B, H), jnp.float32), jnp.zeros((B, H), jnp.float32))
    (h_last, _), ys = lax.scan(step, init, jnp.transpose(xs, (1, 0, 2)))
    ys = jnp.transpose(ys, (1, 0, 2))
    if reverse:
        ys = jnp.flip(ys, axis=1)
    return ys, h_last


def ref_forward(x, p, *, hidden, pool=True):
    ys_f, h_f = _ref_lstm_direction(x, p["wih_f"], p["whh_f"],
                                    p["bih_f"], p["bhh_f"], False)
    ys_b, h_b = _ref_lstm_direction(x, p["wih_b"], p["whh_b"],
                                    p["bih_b"], p["bhh_b"], True)
    out = jnp.concatenate([ys_f, ys_b], axis=-1)                  # (B, S, 2H)
    hn = jnp.stack([h_f, h_b], axis=0)                            # (2, B, H)
    if pool:
        B, S, DH = out.shape
        # Raw .view reinterpretation (NOT a transpose) — matches the module.
        return jnp.mean(out.reshape(B, DH, S), axis=-1)
    return hn.reshape(hn.shape[0], -1)


# ----------------------------------------------------------------------------
# Main
# ----------------------------------------------------------------------------
if __name__ == "__main__":
    # Module config: LSTM_rnn(in_size=16, hidden=32, bidirection=True,
    #                         num_layers=1, batch_size=2, pool=True)
    B, S, I, H = 2, 8, 16, 32

    key = jax.random.PRNGKey(0)
    keys = jax.random.split(key, 9)
    k = 1.0 / np.sqrt(H)  # PyTorch nn.LSTM default init: U(-1/sqrt(H), 1/sqrt(H))
    u = lambda kk, shape: jax.random.uniform(kk, shape, jnp.float32, -k, k)

    params = {
        "wih_f": u(keys[0], (4 * H, I)), "whh_f": u(keys[1], (4 * H, H)),
        "bih_f": u(keys[2], (4 * H,)),   "bhh_f": u(keys[3], (4 * H,)),
        "wih_b": u(keys[4], (4 * H, I)), "whh_b": u(keys[5], (4 * H, H)),
        "bih_b": u(keys[6], (4 * H,)),   "bhh_b": u(keys[7], (4 * H,)),
    }
    x = jax.random.normal(keys[8], (B, S, I), jnp.float32)

    # Weight fusion happens ONCE here, not per forward call.
    fused = prepare_lstm_params(params, hidden=H, seq_len=S)

    # pool=True path (the configured module).  bf16 MXU operands -> loosened
    # tolerances vs the f32 reference.
    out = jax.block_until_ready(lstm_rnn_forward(x, fused, hidden=H, pool=True))
    assert out.shape == (B, 2 * H), out.shape
    ref = jax.block_until_ready(ref_forward(x, params, hidden=H, pool=True))
    np.testing.assert_allclose(np.asarray(out), np.asarray(ref),
                               rtol=2e-2, atol=2e-2)

    # pool=False path (returns flattened hn)
    out_hn = jax.block_until_ready(lstm_rnn_forward(x, fused, hidden=H, pool=False))
    ref_hn = jax.block_until_ready(ref_forward(x, params, hidden=H, pool=False))
    np.testing.assert_allclose(np.asarray(out_hn), np.asarray(ref_hn),
                               rtol=2e-2, atol=2e-2)

    # TODO(synk): dropout=0.5 in get_lstm is a forward no-op for num_layers=1; not modeled.
    print("KERNEL_OK")
</pallas_src>

<mosaic_0001>
module attributes {stable_mosaic.version = 11 : i64} {
  func.func @_lstm_fused_kernel(%arg0: memref<16x32xbf16, #tpu.memory_space<vmem>>, %arg1: memref<32x256xbf16, #tpu.memory_space<vmem>>, %arg2: memref<64x256xbf16, #tpu.memory_space<vmem>>, %arg3: memref<1x256xf32, #tpu.memory_space<vmem>>, %arg4: memref<512x64xbf16, #tpu.memory_space<vmem>>, %arg5: memref<2x128xf32, #tpu.memory_space<vmem>>, %arg6: memref<16x256xf32, #tpu.memory_space<vmem>>) attributes {dimension_semantics = [], scalar_prefetch = 0 : i64, scratch_operands = 1 : i64, tpu.core_type = #tpu.core_type<tc>} {
    %c0 = arith.constant 0 : index
    %c0_0 = arith.constant 0 : index
    %0 = vector.load %arg0[%c0, %c0_0] : memref<16x32xbf16, #tpu.memory_space<vmem>>, vector<16x32xbf16>
    %c0_1 = arith.constant 0 : index
    %c0_2 = arith.constant 0 : index
    %1 = vector.load %arg1[%c0_1, %c0_2] : memref<32x256xbf16, #tpu.memory_space<vmem>>, vector<32x256xbf16>
    %cst = arith.constant dense<0.000000e+00> : vector<16x256xf32>
    %2 = tpu.matmul %0, %1, %cst {dimension_numbers = #tpu.dot_dimension_numbers<[1], [0], [0], [1], [0, 0, 1, 1], [], []>} : vector<16x32xbf16>, vector<32x256xbf16>, vector<16x256xf32> -> vector<16x256xf32>
    %c0_3 = arith.constant 0 : index
    %c0_4 = arith.constant 0 : index
    %3 = vector.load %arg3[%c0_3, %c0_4] : memref<1x256xf32, #tpu.memory_space<vmem>>, vector<1x256xf32>
    %4 = vector.broadcast %3 : vector<1x256xf32> to vector<16x256xf32>
    %5 = arith.addf %2, %4 : vector<16x256xf32>
    %c0_5 = arith.constant 0 : index
    %c0_6 = arith.constant 0 : index
    %6 = vector.load %arg6[%c0_5, %c0_6] : memref<16x256xf32, #tpu.memory_space<vmem>>, vector<16x256xf32>
    tpu.vector_store %arg6[%c0_5, %c0_6], %5 {strides = array<i32>} : memref<16x256xf32, #tpu.memory_space<vmem>>, vector<16x256xf32>,
    %cst_7 = arith.constant 0.000000e+00 : f32
    %7 = vector.broadcast %cst_7 : f32 to vector<2x64xf32>
    %cst_8 = arith.constant 0.000000e+00 : f32
    %8 = vector.broadcast %cst_8 : f32 to vector<2x64xf32>
    %c0_9 = arith.constant 0 : index
    %c0_10 = arith.constant 0 : index
    %9 = vector.load %arg6[%c0_9, %c0_10] : memref<16x256xf32, #tpu.memory_space<vmem>>, vector<2x256xf32>
    %10 = arith.truncf %7 : vector<2x64xf32> to vector<2x64xbf16>
    %c0_11 = arith.constant 0 : index
    %c0_12 = arith.constant 0 : index
    %11 = vector.load %arg2[%c0_11, %c0_12] : memref<64x256xbf16, #tpu.memory_space<vmem>>, vector<64x256xbf16>
    %cst_13 = arith.constant dense<0.000000e+00> : vector<2x256xf32>
    %12 = tpu.matmul %10, %11, %cst_13 {dimension_numbers = #tpu.dot_dimension_numbers<[1], [0], [0], [1], [0, 0, 1, 1], [], []>} : vector<2x64xbf16>, vector<64x256xbf16>, vector<2x256xf32> -> vector<2x256xf32>
    %13 = arith.addf %9, %12 : vector<2x256xf32>
    %14 = arith.negf %13 : vector<2x256xf32>
    %15 = math.exp %14 : vector<2x256xf32>
    %cst_14 = arith.constant 1.000000e+00 : f32
    %16 = vector.broadcast %cst_14 : f32 to vector<2x256xf32>
    %17 = arith.addf %16, %15 : vector<2x256xf32>
    %18 = arith.divf %16, %17 : vector<2x256xf32>
    %19 = vector.extract_strided_slice %18 {offsets = [0, 0], sizes = [2, 64], strides = [1, 1]} : vector<2x256xf32> to vector<2x64xf32>
    %20 = vector.extract_strided_slice %18 {offsets = [0, 64], sizes = [2, 64], strides = [1, 1]} : vector<2x256xf32> to vector<2x64xf32>
    %21 = vector.extract_strided_slice %18 {offsets = [0, 128], sizes = [2, 64], strides = [1, 1]} : vector<2x256xf32> to vector<2x64xf32>
    %22 = vector.extract_strided_slice %13 {offsets = [0, 192], sizes = [2, 64], strides = [1, 1]} : vector<2x256xf32> to vector<2x64xf32>
    %23 = math.tanh %22 : vector<2x64xf32>
    %24 = arith.mulf %20, %8 : vector<2x64xf32>
    %25 = arith.mulf %19, %23 : vector<2x64xf32>
    %26 = arith.addf %24, %25 : vector<2x64xf32>
    %27 = math.tanh %26 : vector<2x64xf32>
    %28 = arith.mulf %21, %27 : vector<2x64xf32>
    %c2 = arith.constant 2 : index
    %c0_15 = arith.constant 0 : index
    %29 = vector.load %arg6[%c2, %c0_15] : memref<16x256xf32, #tpu.memory_space<vmem>>, vector<2x256xf32>
    %30 = arith.truncf %28 : vector<2x64xf32> to vector<2x64xbf16>
    %c0_16 = arith.constant 0 : index
    %c0_17 = arith.constant 0 : index
    %31 = vector.load %arg2[%c0_16, %c0_17] : memref<64x256xbf16, #tpu.memory_space<vmem>>, vector<64x256xbf16>
    %cst_18 = arith.constant dense<0.000000e+00> : vector<2x256xf32>
    %32 = tpu.matmul %30, %31, %cst_18 {dimension_numbers = #tpu.dot_dimension_numbers<[1], [0], [0], [1], [0, 0, 1, 1], [], []>} : vector<2x64xbf16>, vector<64x256xbf16>, vector<2x256xf32> -> vector<2x256xf32>
    %33 = arith.addf %29, %32 : vector<2x256xf32>
    %34 = arith.negf %33 : vector<2x256xf32>
    %35 = math.exp %34 : vector<2x256xf32>
    %cst_19 = arith.constant 1.000000e+00 : f32
    %36 = vector.broadcast %cst_19 : f32 to vector<2x256xf32>
    %37 = arith.addf %36, %35 : vector<2x256xf32>
    %38 = arith.divf %36, %37 : vector<2x256xf32>
    %39 = vector.extract_strided_slice %38 {offsets = [0, 0], sizes = [2, 64], strides = [1, 1]} : vector<2x256xf32> to vector<2x64xf32>
    %40 = vector.extract_strided_slice %38 {offsets = [0, 64], sizes = [2, 64], strides = [1, 1]} : vector<2x256xf32> to vector<2x64xf32>
    %41 = vector.extract_strided_slice %38 {offsets = [0, 128], sizes = [2, 64], strides = [1, 1]} : vector<2x256xf32> to vector<2x64xf32>
    %42 = vector.extract_strided_slice %33 {offsets = [0, 192], sizes = [2, 64], strides = [1, 1]} : vector<2x256xf32> to vector<2x64xf32>
    %43 = math.tanh %42 : vector<2x64xf32>
    %44 = arith.mulf %40, %26 : vector<2x64xf32>
    %45 = arith.mulf %39, %43 : vector<2x64xf32>
    %46 = arith.addf %44, %45 : vector<2x64xf32>
    %47 = math.tanh %46 : vector<2x64xf32>
    %48 = arith.mulf %41, %47 : vector<2x64xf32>
    %c4 = arith.constant 4 : index
    %c0_20 = arith.constant 0 : index
    %49 = vector.load %arg6[%c4, %c0_20] : memref<16x256xf32, #tpu.memory_space<vmem>>, vector<2x256xf32>
    %50 = arith.truncf %48 : vector<2x64xf32> to vector<2x64xbf16>
    %c0_21 = arith.constant 0 : index
    %c0_22 = arith.constant 0 : index
    %51 = vector.load %arg2[%c0_21, %c0_22] : memref<64x256xbf16, #tpu.memory_space<vmem>>, vector<64x256xbf16>
    %cst_23 = arith.constant dense<0.000000e+00> : vector<2x256xf32>
    %52 = tpu.matmul %50, %51, %cst_23 {dimension_numbers = #tpu.dot_dimension_numbers<[1], [0], [0], [1], [0, 0, 1, 1], [], []>} : vector<2x64xbf16>, vector<64x256xbf16>, vector<2x256xf32> -> vector<2x256xf32>
    %53 = arith.addf %49, %52 : vector<2x256xf32>
    %54 = arith.negf %53 : vector<2x256xf32>
    %55 = math.exp %54 : vector<2x256xf32>
    %cst_24 = arith.constant 1.000000e+00 : f32
    %56 = vector.broadcast %cst_24 : f32 to vector<2x256xf32>
    %57 = arith.addf %56, %55 : vector<2x256xf32>
    %58 = arith.divf %56, %57 : vector<2x256xf32>
    %59 = vector.extract_strided_slice %58 {offsets = [0, 0], sizes = [2, 64], strides = [1, 1]} : vector<2x256xf32> to vector<2x64xf32>
    %60 = vector.extract_strided_slice %58 {offsets = [0, 64], sizes = [2, 64], strides = [1, 1]} : vector<2x256xf32> to vector<2x64xf32>
    %61 = vector.extract_strided_slice %58 {offsets = [0, 128], sizes = [2, 64], strides = [1, 1]} : vector<2x256xf32> to vector<2x64xf32>
    %62 = vector.extract_strided_slice %53 {offsets = [0, 192], sizes = [2, 64], strides = [1, 1]} : vector<2x256xf32> to vector<2x64xf32>
    %63 = math.tanh %62 : vector<2x64xf32>
    %64 = arith.mulf %60, %46 : vector<2x64xf32>
    %65 = arith.mulf %59, %63 : vector<2x64xf32>
    %66 = arith.addf %64, %65 : vector<2x64xf32>
    %67 = math.tanh %66 : vector<2x64xf32>
    %68 = arith.mulf %61, %67 : vector<2x64xf32>
    %c6 = arith.constant 6 : index
    %c0_25 = arith.constant 0 : index
    %69 = vector.load %arg6[%c6, %c0_25] : memref<16x256xf32, #tpu.memory_space<vmem>>, vector<2x256xf32>
    %70 = arith.truncf %68 : vector<2x64xf32> to vector<2x64xbf16>
    %c0_26 = arith.constant 0 : index
    %c0_27 = arith.constant 0 : index
    %71 = vector.load %arg2[%c0_26, %c0_27] : memref<64x256xbf16, #tpu.memory_space<vmem>>, vector<64x256xbf16>
    %cst_28 = arith.constant dense<0.000000e+00> : vector<2x256xf32>
    %72 = tpu.matmul %70, %71, %cst_28 {dimension_numbers = #tpu.dot_dimension_numbers<[1], [0], [0], [1], [0, 0, 1, 1], [], []>} : vector<2x64xbf16>, vector<64x256xbf16>, vector<2x256xf32> -> vector<2x256xf32>
    %73 = arith.addf %69, %72 : vector<2x256xf32>
    %74 = arith.negf %73 : vector<2x256xf32>
    %75 = math.exp %74 : vector<2x256xf32>
    %cst_29 = arith.constant 1.000000e+00 : f32
    %76 = vector.broadcast %cst_29 : f32 to vector<2x256xf32>
    %77 = arith.addf %76, %75 : vector<2x256xf32>
    %78 = arith.divf %76, %77 : vector<2x256xf32>
    %79 = vector.extract_strided_slice %78 {offsets = [0, 0], sizes = [2, 64], strides = [1, 1]} : vector<2x256xf32> to vector<2x64xf32>
    %80 = vector.extract_strided_slice %78 {offsets = [0, 64], sizes = [2, 64], strides = [1, 1]} : vector<2x256xf32> to vector<2x64xf32>
    %81 = vector.extract_strided_slice %78 {offsets = [0, 128], sizes = [2, 64], strides = [1, 1]} : vector<2x256xf32> to vector<2x64xf32>
    %82 = vector.extract_strided_slice %73 {offsets = [0, 192], sizes = [2, 64], strides = [1, 1]} : vector<2x256xf32> to vector<2x64xf32>
    %83 = math.tanh %82 : vector<2x64xf32>
    %84 = arith.mulf %80, %66 : vector<2x64xf32>
    %85 = arith.mulf %79, %83 : vector<2x64xf32>
    %86 = arith.addf %84, %85 : vector<2x64xf32>
    %87 = math.tanh %86 : vector<2x64xf32>
    %88 = arith.mulf %81, %87 : vector<2x64xf32>
    %c8 = arith.constant 8 : index
    %c0_30 = arith.constant 0 : index
    %89 = vector.load %arg6[%c8, %c0_30] : memref<16x256xf32, #tpu.memory_space<vmem>>, vector<2x256xf32>
    %90 = arith.truncf %88 : vector<2x64xf32> to vector<2x64xbf16>
    %c0_31 = arith.constant 0 : index
    %c0_32 = arith.constant 0 : index
    %91 = vector.load %arg2[%c0_31, %c0_32] : memref<64x256xbf16, #tpu.memory_space<vmem>>, vector<64x256xbf16>
    %cst_33 = arith.constant dense<0.000000e+00> : vector<2x256xf32>
    %92 = tpu.matmul %90, %91, %cst_33 {dimension_numbers = #tpu.dot_dimension_numbers<[1], [0], [0], [1], [0, 0, 1, 1], [], []>} : vector<2x64xbf16>, vector<64x256xbf16>, vector<2x256xf32> -> vector<2x256xf32>
    %93 = arith.addf %89, %92 : vector<2x256xf32>
    %94 = arith.negf %93 : vector<2x256xf32>
    %95 = math.exp %94 : vector<2x256xf32>
    %cst_34 = arith.constant 1.000000e+00 : f32
    %96 = vector.broadcast %cst_34 : f32 to vector<2x256xf32>
    %97 = arith.addf %96, %95 : vector<2x256xf32>
    %98 = arith.divf %96, %97 : vector<2x256xf32>
    %99 = vector.extract_strided_slice %98 {offsets = [0, 0], sizes = [2, 64], strides = [1, 1]} : vector<2x256xf32> to vector<2x64xf32>
    %100 = vector.extract_strided_slice %98 {offsets = [0, 64], sizes = [2, 64], strides = [1, 1]} : vector<2x256xf32> to vector<2x64xf32>
    %101 = vector.extract_strided_slice %98 {offsets = [0, 128], sizes = [2, 64], strides = [1, 1]} : vector<2x256xf32> to vector<2x64xf32>
    %102 = vector.extract_strided_slice %93 {offsets = [0, 192], sizes = [2, 64], strides = [1, 1]} : vector<2x256xf32> to vector<2x64xf32>
    %103 = math.tanh %102 : vector<2x64xf32>
    %104 = arith.mulf %100, %86 : vector<2x64xf32>
    %105 = arith.mulf %99, %103 : vector<2x64xf32>
    %106 = arith.addf %104, %105 : vector<2x64xf32>
    %107 = math.tanh %106 : vector<2x64xf32>
    %108 = arith.mulf %101, %107 : vector<2x64xf32>
    %c10 = arith.constant 10 : index
    %c0_35 = arith.constant 0 : index
    %109 = vector.load %arg6[%c10, %c0_35] : memref<16x256xf32, #tpu.memory_space<vmem>>, vector<2x256xf32>
    %110 = arith.truncf %108 : vector<2x64xf32> to vector<2x64xbf16>
    %c0_36 = arith.constant 0 : index
    %c0_37 = arith.constant 0 : index
    %111 = vector.load %arg2[%c0_36, %c0_37] : memref<64x256xbf16, #tpu.memory_space<vmem>>, vector<64x256xbf16>
    %cst_38 = arith.constant dense<0.000000e+00> : vector<2x256xf32>
    %112 = tpu.matmul %110, %111, %cst_38 {dimension_numbers = #tpu.dot_dimension_numbers<[1], [0], [0], [1], [0, 0, 1, 1], [], []>} : vector<2x64xbf16>, vector<64x256xbf16>, vector<2x256xf32> -> vector<2x256xf32>
    %113 = arith.addf %109, %112 : vector<2x256xf32>
    %114 = arith.negf %113 : vector<2x256xf32>
    %115 = math.exp %114 : vector<2x256xf32>
    %cst_39 = arith.constant 1.000000e+00 : f32
    %116 = vector.broadcast %cst_39 : f32 to vector<2x256xf32>
    %117 = arith.addf %116, %115 : vector<2x256xf32>
    %118 = arith.divf %116, %117 : vector<2x256xf32>
    %119 = vector.extract_strided_slice %118 {offsets = [0, 0], sizes = [2, 64], strides = [1, 1]} : vector<2x256xf32> to vector<2x64xf32>
    %120 = vector.extract_strided_slice %118 {offsets = [0, 64], sizes = [2, 64], strides = [1, 1]} : vector<2x256xf32> to vector<2x64xf32>
    %121 = vector.extract_strided_slice %118 {offsets = [0, 128], sizes = [2, 64], strides = [1, 1]} : vector<2x256xf32> to vector<2x64xf32>
    %122 = vector.extract_strided_slice %113 {offsets = [0, 192], sizes = [2, 64], strides = [1, 1]} : vector<2x256xf32> to vector<2x64xf32>
    %123 = math.tanh %122 : vector<2x64xf32>
    %124 = arith.mulf %120, %106 : vector<2x64xf32>
    %125 = arith.mulf %119, %123 : vector<2x64xf32>
    %126 = arith.addf %124, %125 : vector<2x64xf32>
    %127 = math.tanh %126 : vector<2x64xf32>
    %128 = arith.mulf %121, %127 : vector<2x64xf32>
    %c12 = arith.constant 12 : index
    %c0_40 = arith.constant 0 : index
    %129 = vector.load %arg6[%c12, %c0_40] : memref<16x256xf32, #tpu.memory_space<vmem>>, vector<2x256xf32>
    %130 = arith.truncf %128 : vector<2x64xf32> to vector<2x64xbf16>
    %c0_41 = arith.constant 0 : index
    %c0_42 = arith.constant 0 : index
    %131 = vector.load %arg2[%c0_41, %c0_42] : memref<64x256xbf16, #tpu.memory_space<vmem>>, vector<64x256xbf16>
    %cst_43 = arith.constant dense<0.000000e+00> : vector<2x256xf32>
    %132 = tpu.matmul %130, %131, %cst_43 {dimension_numbers = #tpu.dot_dimension_numbers<[1], [0], [0], [1], [0, 0, 1, 1], [], []>} : vector<2x64xbf16>, vector<64x256xbf16>, vector<2x256xf32> -> vector<2x256xf32>
    %133 = arith.addf %129, %132 : vector<2x256xf32>
    %134 = arith.negf %133 : vector<2x256xf32>
    %135 = math.exp %134 : vector<2x256xf32>
    %cst_44 = arith.constant 1.000000e+00 : f32
    %136 = vector.broadcast %cst_44 : f32 to vector<2x256xf32>
    %137 = arith.addf %136, %135 : vector<2x256xf32>
    %138 = arith.divf %136, %137 : vector<2x256xf32>
    %139 = vector.extract_strided_slice %138 {offsets = [0, 0], sizes = [2, 64], strides = [1, 1]} : vector<2x256xf32> to vector<2x64xf32>
    %140 = vector.extract_strided_slice %138 {offsets = [0, 64], sizes = [2, 64], strides = [1, 1]} : vector<2x256xf32> to vector<2x64xf32>
    %141 = vector.extract_strided_slice %138 {offsets = [0, 128], sizes = [2, 64], strides = [1, 1]} : vector<2x256xf32> to vector<2x64xf32>
    %142 = vector.extract_strided_slice %133 {offsets = [0, 192], sizes = [2, 64], strides = [1, 1]} : vector<2x256xf32> to vector<2x64xf32>
    %143 = math.tanh %142 : vector<2x64xf32>
    %144 = arith.mulf %140, %126 : vector<2x64xf32>
    %145 = arith.mulf %139, %143 : vector<2x64xf32>
    %146 = arith.addf %144, %145 : vector<2x64xf32>
    %147 = math.tanh %146 : vector<2x64xf32>
    %148 = arith.mulf %141, %147 : vector<2x64xf32>
    %c14 = arith.constant 14 : index
    %c0_45 = arith.constant 0 : index
    %149 = vector.load %arg6[%c14, %c0_45] : memref<16x256xf32, #tpu.memory_space<vmem>>, vector<2x256xf32>
    %150 = arith.truncf %148 : vector<2x64xf32> to vector<2x64xbf16>
    %c0_46 = arith.constant 0 : index
    %c0_47 = arith.constant 0 : index
    %151 = vector.load %arg2[%c0_46, %c0_47] : memref<64x256xbf16, #tpu.memory_space<vmem>>, vector<64x256xbf16>
    %cst_48 = arith.constant dense<0.000000e+00> : vector<2x256xf32>
    %152 = tpu.matmul %150, %151, %cst_48 {dimension_numbers = #tpu.dot_dimension_numbers<[1], [0], [0], [1], [0, 0, 1, 1], [], []>} : vector<2x64xbf16>, vector<64x256xbf16>, vector<2x256xf32> -> vector<2x256xf32>
    %153 = arith.addf %149, %152 : vector<2x256xf32>
    %154 = arith.negf %153 : vector<2x256xf32>
    %155 = math.exp %154 : vector<2x256xf32>
    %cst_49 = arith.constant 1.000000e+00 : f32
    %156 = vector.broadcast %cst_49 : f32 to vector<2x256xf32>
    %157 = arith.addf %156, %155 : vector<2x256xf32>
    %158 = arith.divf %156, %157 : vector<2x256xf32>
    %159 = vector.extract_strided_slice %158 {offsets = [0, 0], sizes = [2, 64], strides = [1, 1]} : vector<2x256xf32> to vector<2x64xf32>
    %160 = vector.extract_strided_slice %158 {offsets = [0, 64], sizes = [2, 64], strides = [1, 1]} : vector<2x256xf32> to vector<2x64xf32>
    %161 = vector.extract_strided_slice %158 {offsets = [0, 128], sizes = [2, 64], strides = [1, 1]} : vector<2x256xf32> to vector<2x64xf32>
    %162 = vector.extract_strided_slice %153 {offsets = [0, 192], sizes = [2, 64], strides = [1, 1]} : vector<2x256xf32> to vector<2x64xf32>
    %163 = math.tanh %162 : vector<2x64xf32>
    %164 = arith.mulf %160, %146 : vector<2x64xf32>
    %165 = arith.mulf %159, %163 : vector<2x64xf32>
    %166 = arith.addf %164, %165 : vector<2x64xf32>
    %167 = math.tanh %166 : vector<2x64xf32>
    %168 = arith.mulf %161, %167 : vector<2x64xf32>
    %169 = tpu.concatenate %28, %48, %68, %88, %108, %128, %148, %168 in 1 : vector<2x64xf32>, vector<2x64xf32>, vector<2x64xf32>, vector<2x64xf32>, vector<2x64xf32>, vector<2x64xf32>, vector<2x64xf32>, vector<2x64xf32> -> vector<2x512xf32>
    %170 = arith.truncf %169 : vector<2x512xf32> to vector<2x512xbf16>
    %c0_50 = arith.constant 0 : index
    %c0_51 = arith.constant 0 : index
    %171 = vector.load %arg4[%c0_50, %c0_51] : memref<512x64xbf16, #tpu.memory_space<vmem>>, vector<512x64xbf16>
    %cst_52 = arith.constant dense<0.000000e+00> : vector<2x64xf32>
    %172 = tpu.matmul %170, %171, %cst_52 {dimension_numbers = #tpu.dot_dimension_numbers<[1], [0], [0], [1], [0, 0, 1, 1], [], []>} : vector<2x512xbf16>, vector<512x64xbf16>, vector<2x64xf32> -> vector<2x64xf32>
    %173 = tpu.concatenate %172, %168 in 1 : vector<2x64xf32>, vector<2x64xf32> -> vector<2x128xf32>
    %c0_53 = arith.constant 0 : index
    %c0_54 = arith.constant 0 : index
    %174 = vector.load %arg5[%c0_53, %c0_54] : memref<2x128xf32, #tpu.memory_space<vmem>>, vector<2x128xf32>
    tpu.vector_store %arg5[%c0_53, %c0_54], %173 {strides = array<i32>} : memref<2x128xf32, #tpu.memory_space<vmem>>, vector<2x128xf32>,
    return
  }
}

</mosaic_0001>

<llo_original>
// kernel: lstm_rnn_forward.1
$region0: #{lstm_rnn_forward.1}
  #allocation0 [shape = 'u32[]', space=smem, size = 0x4, offset = 0x4, fixed_abs, tag = 'smem constant byte address 0x4 - core index']
  #allocation1 [shape = 'u32[144,128]{1,0:T(1,128)}', space=vmem, size = 0x12000, scoped, tag = 'internal scratch']
  #allocation2 [shape = 'f32[16,256]{1,0:T(8,128)}', space=vmem, size = 0x4000, scoped, tag = 'scratch operand']
  %s0 = inlined_call_operand.vmem [shape: bf16[16,32], index: 0, kind: input, shape index: {}]
  %s1 = inlined_call_operand.vmem [shape: bf16[32,256], index: 1, kind: input, shape index: {}]
  %s2 = inlined_call_operand.vmem [shape: bf16[64,256], index: 2, kind: input, shape index: {}]
  %s3 = inlined_call_operand.vmem [shape: f32[1,256], index: 3, kind: input, shape index: {}]
  %s4 = inlined_call_operand.vmem [shape: bf16[512,64], index: 4, kind: input, shape index: {}]
  %s5 = inlined_call_operand.hbm [shape: f32[2,128], index: 5, kind: output, shape index: {}]
  %s6 = sld [smem:[#allocation0]]
  $region30: #{lstm_rnn_forward.1} parent=0
    _
  %s8 = ssub.s32 1, %s6
  %s9 = scalar_select 0, %s8, %s6
  $region1: #{lstm_rnn_forward.1} parent=0
    #allocation3 [shape = 'u8[1024]{0}', space=vmem, size = 0x400, scoped, tag = 'output window, operand 0, single buffered']
    #allocation4 [shape = 's32[1]{0}', space=sflag, size = 0x4, scoped, tag = 'scoped memory for lstm_rnn_forward.1']
    %10 = vsyncpa [#allocation4], 0
    // Predicated region
    $region2: #{lstm_rnn_forward.1} parent=1 // pred_check
      _
    $region3: #{lstm_rnn_forward.1} parent=1 // pred_check_branch
      %12 = sbr.rel (0) target = $region5
    $region4: #{lstm_rnn_forward.1} parent=1 // pred_region
      _
    $region5: #{lstm_rnn_forward.1} parent=1 // pred_fallthru
      _
    // Predicated region
    $region6: #{lstm_rnn_forward.1} parent=1 // pred_check
      _
    $region7: #{lstm_rnn_forward.1} parent=1 // pred_check_branch
      %14 = sbr.rel (0) target = $region9
    $region8: #{lstm_rnn_forward.1} parent=1 // pred_region
      _
    $region9: #{lstm_rnn_forward.1} parent=1 // pred_fallthru
      _
    // Predicated region
    $region10: #{lstm_rnn_forward.1} parent=1 // pred_check
      _
    $region11: #{lstm_rnn_forward.1} parent=1 // pred_check_branch
      %16 = sbr.rel (0) target = $region13
    $region12: #{lstm_rnn_forward.1} parent=1 // pred_region
      _
    $region13: #{lstm_rnn_forward.1} parent=1 // pred_fallthru
      _
    // Predicated region
    $region14: #{lstm_rnn_forward.1} parent=1 // pred_check
      _
    $region15: #{lstm_rnn_forward.1} parent=1 // pred_check_branch
      %18 = sbr.rel (0) target = $region17
    $region16: #{lstm_rnn_forward.1} parent=1 // pred_region
      _
    $region17: #{lstm_rnn_forward.1} parent=1 // pred_fallthru
      _
    // Predicated region
    $region18: #{lstm_rnn_forward.1} parent=1 // pred_check
      _
    $region19: #{lstm_rnn_forward.1} parent=1 // pred_check_branch
      %20 = sbr.rel (0) target = $region21
    $region20: #{lstm_rnn_forward.1} parent=1 // pred_region
      _
    $region21: #{lstm_rnn_forward.1} parent=1 // pred_fallthru
      _
    %v22 = vld [vmem:[%s0] sm:$0xf]
    %v23 = vld [vmem:[%s0 + $0x4] sm:$0xf]
    %v24 = vld [vmem:[%s1] sm:$0xff]
    %v25 = vld [vmem:[%s1 + $0x8] sm:$0xff]
    %v26 = vld [vmem:[%s1 + $0x10] sm:$0xff]
    %v27 = vld [vmem:[%s1 + $0x18] sm:$0xff]
    %v28 = vld [vmem:[%s3] sm:$0x3]
    %v30 = vlaneseq
    %v31 = vshrl.u32 %v30, 7
    %v32 = vsub.s32 0, %v31
    %v33 = vrot.slane %v28, %v32
    %v34 = vlaneseq
    %v35 = vshrl.u32 %v34, 7
    %v36 = vsub.s32 1, %v35
    %v37 = vrot.slane %v28, %v36
    %v42 = vunpack.c.l.b16 %v22
    %v43 = vunpack.c.l.b16 %v23
    %v44 = vpack.c.b16 %v43, %v42
    %v49 = vunpack.c.l.b16 %v24
    %v50 = vunpack.c.h.b16 %v24
    %v51 = vunpack.c.l.b16 %v25
    %v52 = vunpack.c.h.b16 %v25
    %v53 = vunpack.c.l.b16 %v26
    %v54 = vunpack.c.h.b16 %v26
    %v55 = vunpack.c.l.b16 %v27
    %v56 = vunpack.c.h.b16 %v27
    %v57 = vpack.c.b16 %v51, %v49
    %v58 = vpack.c.b16 %v52, %v50
    %v59 = vpack.c.b16 %v55, %v53
    %v60 = vpack.c.b16 %v56, %v54
    %vm65 = vcmask 261120
    %v67 = vsel %vm65, %v44, 0
    %69 = vmatprep.subr.bf16.mxu0 %v58
    %70 = vmatpush1.bf16.msra.mxu0 %v57
    %71 = vmatprep.subr.bf16.mxu0 %v60
    %72 = vmatpush1.bf16.msra.mxu0 %v59
    %73 = vmatprep.subr.bf16.mxu0 0
    %74 = vmatpush1.bf16.msra.mxu0 0
    %75 = vmatprep.subr.bf16.mxu0 0
    %76 = vmatpush1.bf16.msra.mxu0 0
    %77 = vmatprep.subr.bf16.mxu0 0
    %78 = vmatpush1.bf16.msra.mxu0 0
    %79 = vmatprep.subr.bf16.mxu0 0
    %80 = vmatpush1.bf16.msra.mxu0 0
    %81 = vmatprep.subr.bf16.mxu0 0
    %82 = vmatpush1.bf16.msra.mxu0 0
    %83 = vmatprep.subr.bf16.mxu0 0
    %84 = vmatpush1.bf16.msra.mxu0 0
    %85 = vmatprep.subr.bf16.mxu0 0
    %86 = vmatpush1.bf16.msra.mxu0 0
    %87 = vmatprep.subr.bf16.mxu0 0
    %88 = vmatpush1.bf16.msra.mxu0 0
    %89 = vmatprep.subr.bf16.mxu0 0
    %90 = vmatpush1.bf16.msra.mxu0 0
    %91 = vmatprep.subr.bf16.mxu0 0
    %92 = vmatpush1.bf16.msra.mxu0 0
    %93 = vmatprep.subr.bf16.mxu0 0
    %94 = vmatpush1.bf16.msra.mxu0 0
    %95 = vmatprep.subr.bf16.mxu0 0
    %96 = vmatpush1.bf16.msra.mxu0 0
    %97 = vmatprep.subr.bf16.mxu0 0
    %98 = vmatpush1.bf16.msra.mxu0 0
    %99 = vmatprep.subr.bf16.mxu0 0
    %100 = vmatpush1.bf16.msra.mxu0 0
    %101 = vmatprep.mubr.bf16.mxu0 0
    %102 = vmatmul.mubr.bf16.gmra.mrb[0].mxu0 %v67
    %v103 = vpop.f32.mrb[0].mxu0
    %v104 = vadd.f32 %v33, %v103
    %v105 = vpop.f32.mrb[0].mxu0
    %v106 = vadd.f32 %v37, %v105
    %v107 = vpop.f32.mrb[0].mxu0
    %v108 = vadd.f32 %v33, %v107
    %v109 = vpop.f32.mrb[0].mxu0
    %v110 = vadd.f32 %v37, %v109
    %111 = vdwg.mxu0
    %112 = vst [vmem:[#allocation2] sm:$0xff] %v104
    %113 = vst [vmem:[#allocation2 + $0x8] sm:$0xff] %v106
    %114 = vst [vmem:[#allocation2 + $0x10] sm:$0xff] %v108
    %115 = vst [vmem:[#allocation2 + $0x18] sm:$0xff] %v110
    %v116 = vld [vmem:[#allocation2] sm:$0x3]
    %v117 = vld [vmem:[#allocation2 + $0x8] sm:$0x3]
    %v118 = vld [vmem:[%s2] sm:$0xff]
    %v119 = vld [vmem:[%s2 + $0x8] sm:$0xff]
    %v120 = vld [vmem:[%s2 + $0x10] sm:$0xff]
    %v121 = vld [vmem:[%s2 + $0x18] sm:$0xff]
    %v122 = vld [vmem:[%s2 + $0x20] sm:$0xff]
    %v123 = vld [vmem:[%s2 + $0x28] sm:$0xff]
    %v124 = vld [vmem:[%s2 + $0x30] sm:$0xff]
    %v125 = vld [vmem:[%s2 + $0x38] sm:$0xff]
    %v134 = vunpack.c.l.b16 %v118
    %v135 = vunpack.c.h.b16 %v118
    %v136 = vunpack.c.l.b16 %v119
    %v137 = vunpack.c.h.b16 %v119
    %v138 = vunpack.c.l.b16 %v120
    %v139 = vunpack.c.h.b16 %v120
    %v140 = vunpack.c.l.b16 %v121
    %v141 = vunpack.c.h.b16 %v121
    %v142 = vunpack.c.l.b16 %v122
    %v143 = vunpack.c.h.b16 %v122
    %v144 = vunpack.c.l.b16 %v123
    %v145 = vunpack.c.h.b16 %v123
    %v146 = vunpack.c.l.b16 %v124
    %v147 = vunpack.c.h.b16 %v124
    %v148 = vunpack.c.l.b16 %v125
    %v149 = vunpack.c.h.b16 %v125
    %v150 = vpack.c.b16 %v136, %v134
    %v151 = vpack.c.b16 %v137, %v135
    %v152 = vpack.c.b16 %v140, %v138
    %v153 = vpack.c.b16 %v141, %v139
    %v154 = vpack.c.b16 %v144, %v142
    %v155 = vpack.c.b16 %v145, %v143
    %v156 = vpack.c.b16 %v148, %v146
    %v157 = vpack.c.b16 %v149, %v147
    %vm166 = vcmask 523264
    %v168 = vsel %vm166, 0, 0
    %170 = vmatprep.subr.bf16.mxu0 %v151
    %171 = vmatpush1.bf16.msra.mxu0 %v150
    %172 = vmatprep.subr.bf16.mxu0 %v153
    %173 = vmatpush1.bf16.msra.mxu0 %v152
    %174 = vmatprep.subr.bf16.mxu0 %v155
    %175 = vmatpush1.bf16.msra.mxu0 %v154
    %176 = vmatprep.subr.bf16.mxu0 %v157
    %177 = vmatpush1.bf16.msra.mxu0 %v156
    %178 = vmatprep.subr.bf16.mxu0 0
    %179 = vmatpush1.bf16.msra.mxu0 0
    %180 = vmatprep.subr.bf16.mxu0 0
    %181 = vmatpush1.bf16.msra.mxu0 0
    %182 = vmatprep.subr.bf16.mxu0 0
    %183 = vmatpush1.bf16.msra.mxu0 0
    %184 = vmatprep.subr.bf16.mxu0 0
    %185 = vmatpush1.bf16.msra.mxu0 0
    %186 = vmatprep.subr.bf16.mxu0 0
    %187 = vmatpush1.bf16.msra.mxu0 0
    %188 = vmatprep.subr.bf16.mxu0 0
    %189 = vmatpush1.bf16.msra.mxu0 0
    %190 = vmatprep.subr.bf16.mxu0 0
    %191 = vmatpush1.bf16.msra.mxu0 0
    %192 = vmatprep.subr.bf16.mxu0 0
    %193 = vmatpush1.bf16.msra.mxu0 0
    %194 = vmatprep.subr.bf16.mxu0 0
    %195 = vmatpush1.bf16.msra.mxu0 0
    %196 = vmatprep.subr.bf16.mxu0 0
    %197 = vmatpush1.bf16.msra.mxu0 0
    %198 = vmatprep.subr.bf16.mxu0 0
    %199 = vmatpush1.bf16.msra.mxu0 0
    %200 = vmatprep.subr.bf16.mxu0 0
    %201 = vmatpush1.bf16.msra.mxu0 0
    %202 = vmatprep.mubr.bf16.mxu0 0
    %203 = vmatmul.mubr.bf16.gmra.mrb[0].mxu0 %v168
    %v204 = vpop.f32.mrb[0].mxu0
    %v205 = vadd.f32 0.0, %v204
    %v206 = vpop.f32.mrb[0].mxu0
    %v207 = vadd.f32 0.0, %v206
    %v208 = vpop.f32.mrb[0].mxu0
    %v209 = vpop.f32.mrb[0].mxu0
    %210 = vdwg.mxu0
    %v211 = vadd.f32 %v116, %v205
    %v212 = vadd.f32 %v117, %v207
    %v213 = vxor.u32 %v211, 2147483648
    %v214 = vxor.u32 %v212, 2147483648
    %v215 = vmul.f32 %v213, 1.442695
    %v216 = vpow.pop %v215
    %v217 = vmul.f32 %v214, 1.442695
    %v218 = vpow.pop %v217
    %v219 = vadd.f32 %v216, 1.0
    %v220 = vadd.f32 %v218, 1.0
    %v221 = vrcp.pop %v219
    %v222 = vmul.f32 1.0, %v221
    %v223 = vrcp.pop %v220
    %v224 = vmul.f32 1.0, %v223
    %v225 = vtanh.pop %v212
    %v226 = vmul.f32 %v222, 0.0
    %228 = vrot.lane.b32.xlu0 %v225, 64
    %v229 = vpop.permute.xlu0 %228
    %v231 = vmul.f32 %v222, %v229
    %233 = vrot.lane.b32.xlu0 %v231, 64
    %v234 = vpop.permute.xlu0 %233
    %v236 = vadd.f32 %v226, %v234
    %v237 = vtanh.pop %v236
    %239 = vrot.lane.b32.xlu0 %v237, 64
    %v240 = vpop.permute.xlu0 %239
    %v242 = vmul.f32 %v224, %v240
    %v243 = vld [vmem:[#allocation2] sm:$0xc]
    %v244 = vld [vmem:[#allocation2 + $0x8] sm:$0xc]
    %v245 = vpack.c.bf16 %v242, %v242
    %v247 = vsel %vm166, %v245, 0
    %249 = vmatprep.subr.bf16.mxu0 %v151
    %250 = vmatpush1.bf16.msra.mxu0 %v150
    %251 = vmatprep.subr.bf16.mxu0 %v153
    %252 = vmatpush1.bf16.msra.mxu0 %v152
    %253 = vmatprep.subr.bf16.mxu0 %v155
    %254 = vmatpush1.bf16.msra.mxu0 %v154
    %255 = vmatprep.subr.bf16.mxu0 %v157
    %256 = vmatpush1.bf16.msra.mxu0 %v156
    %257 = vmatprep.subr.bf16.mxu0 0
    %258 = vmatpush1.bf16.msra.mxu0 0
    %259 = vmatprep.subr.bf16.mxu0 0
    %260 = vmatpush1.bf16.msra.mxu0 0
    %261 = vmatprep.subr.bf16.mxu0 0
    %262 = vmatpush1.bf16.msra.mxu0 0
    %263 = vmatprep.subr.bf16.mxu0 0
    %264 = vmatpush1.bf16.msra.mxu0 0
    %265 = vmatprep.subr.bf16.mxu0 0
    %266 = vmatpush1.bf16.msra.mxu0 0
    %267 = vmatprep.subr.bf16.mxu0 0
    %268 = vmatpush1.bf16.msra.mxu0 0
    %269 = vmatprep.subr.bf16.mxu0 0
    %270 = vmatpush1.bf16.msra.mxu0 0
    %271 = vmatprep.subr.bf16.mxu0 0
    %272 = vmatpush1.bf16.msra.mxu0 0
    %273 = vmatprep.subr.bf16.mxu0 0
    %274 = vmatpush1.bf16.msra.mxu0 0
    %275 = vmatprep.subr.bf16.mxu0 0
    %276 = vmatpush1.bf16.msra.mxu0 0
    %277 = vmatprep.subr.bf16.mxu0 0
    %278 = vmatpush1.bf16.msra.mxu0 0
    %279 = vmatprep.subr.bf16.mxu0 0
    %280 = vmatpush1.bf16.msra.mxu0 0
    %281 = vmatprep.mubr.bf16.mxu0 0
    %282 = vmatmul.mubr.bf16.gmra.mrb[0].mxu0 %v247
    %v283 = vpop.f32.mrb[0].mxu0
    %v284 = vadd.f32 0.0, %v283
    %v285 = vpop.f32.mrb[0].mxu0
    %v286 = vadd.f32 0.0, %v285
    %v287 = vpop.f32.mrb[0].mxu0
    %v288 = vpop.f32.mrb[0].mxu0
    %289 = vdwg.mxu0
    %v292 = vrot.slane %v284, 6
    %v293 = vrot.slane %v286, 6
    %v296 = vadd.f32 %v243, %v292
    %v297 = vadd.f32 %v244, %v293
    %v298 = vxor.u32 %v296, 2147483648
    %v299 = vxor.u32 %v297, 2147483648
    %v300 = vmul.f32 %v298, 1.442695
    %v301 = vpow.pop %v300
    %v302 = vmul.f32 %v299, 1.442695
    %v303 = vpow.pop %v302
    %v304 = vadd.f32 %v301, 1.0
    %v305 = vadd.f32 %v303, 1.0
    %v306 = vrcp.pop %v304
    %v307 = vmul.f32 1.0, %v306
    %v308 = vrcp.pop %v305
    %v309 = vmul.f32 1.0, %v308
    %v310 = vtanh.pop %v297
    %v312 = vrot.slane %v236, 6
    %v314 = vmul.f32 %v307, %v312
    %316 = vrot.lane.b32.xlu0 %v310, 64
    %v317 = vpop.permute.xlu0 %316
    %v319 = vmul.f32 %v307, %v317
    %321 = vrot.lane.b32.xlu0 %v319, 64
    %v322 = vpop.permute.xlu0 %321
    %v324 = vadd.f32 %v314, %v322
    %v325 = vtanh.pop %v324
    %327 = vrot.lane.b32.xlu0 %v325, 64
    %v328 = vpop.permute.xlu0 %327
    %v330 = vmul.f32 %v309, %v328
    %v331 = vld [vmem:[#allocation2] sm:$0x30]
    %v332 = vld [vmem:[#allocation2 + $0x8] sm:$0x30]
    %v333 = vpack.c.bf16 %v330, %v330
    %v335 = vrot.slane %v333, 1
    %v337 = vsel %vm166, %v335, 0
    %339 = vmatprep.subr.bf16.mxu0 %v151
    %340 = vmatpush1.bf16.msra.mxu0 %v150
    %341 = vmatprep.subr.bf16.mxu0 %v153
    %342 = vmatpush1.bf16.msra.mxu0 %v152
    %343 = vmatprep.subr.bf16.mxu0 %v155
    %344 = vmatpush1.bf16.msra.mxu0 %v154
    %345 = vmatprep.subr.bf16.mxu0 %v157
    %346 = vmatpush1.bf16.msra.mxu0 %v156
    %347 = vmatprep.subr.bf16.mxu0 0
    %348 = vmatpush1.bf16.msra.mxu0 0
    %349 = vmatprep.subr.bf16.mxu0 0
    %350 = vmatpush1.bf16.msra.mxu0 0
    %351 = vmatprep.subr.bf16.mxu0 0
    %352 = vmatpush1.bf16.msra.mxu0 0
    %353 = vmatprep.subr.bf16.mxu0 0
    %354 = vmatpush1.bf16.msra.mxu0 0
    %355 = vmatprep.subr.bf16.mxu0 0
    %356 = vmatpush1.bf16.msra.mxu0 0
    %357 = vmatprep.subr.bf16.mxu0 0
    %358 = vmatpush1.bf16.msra.mxu0 0
    %359 = vmatprep.subr.bf16.mxu0 0
    %360 = vmatpush1.bf16.msra.mxu0 0
    %361 = vmatprep.subr.bf16.mxu0 0
    %362 = vmatpush1.bf16.msra.mxu0 0
    %363 = vmatprep.subr.bf16.mxu0 0
    %364 = vmatpush1.bf16.msra.mxu0 0
    %365 = vmatprep.subr.bf16.mxu0 0
    %366 = vmatpush1.bf16.msra.mxu0 0
    %367 = vmatprep.subr.bf16.mxu0 0
    %368 = vmatpush1.bf16.msra.mxu0 0
    %369 = vmatprep.subr.bf16.mxu0 0
    %370 = vmatpush1.bf16.msra.mxu0 0
    %371 = vmatprep.mubr.bf16.mxu0 0
    %372 = vmatmul.mubr.bf16.gmra.mrb[0].mxu0 %v337
    %v373 = vpop.f32.mrb[0].mxu0
    %v374 = vadd.f32 0.0, %v373
    %v375 = vpop.f32.mrb[0].mxu0
    %v376 = vadd.f32 0.0, %v375
    %v377 = vpop.f32.mrb[0].mxu0
    %v378 = vpop.f32.mrb[0].mxu0
    %379 = vdwg.mxu0
    %v382 = vrot.slane %v374, 4
    %v383 = vrot.slane %v376, 4
    %v386 = vadd.f32 %v331, %v382
    %v387 = vadd.f32 %v332, %v383
    %v388 = vxor.u32 %v386, 2147483648
    %v389 = vxor.u32 %v387, 2147483648
    %v390 = vmul.f32 %v388, 1.442695
    %v391 = vpow.pop %v390
    %v392 = vmul.f32 %v389, 1.442695
    %v393 = vpow.pop %v392
    %v394 = vadd.f32 %v391, 1.0
    %v395 = vadd.f32 %v393, 1.0
    %v396 = vrcp.pop %v394
    %v397 = vmul.f32 1.0, %v396
    %v398 = vrcp.pop %v395
    %v399 = vmul.f32 1.0, %v398
    %v400 = vtanh.pop %v387
    %v402 = vrot.slane %v324, 6
    %v404 = vmul.f32 %v397, %v402
    %406 = vrot.lane.b32.xlu0 %v400, 64
    %v407 = vpop.permute.xlu0 %406
    %v409 = vmul.f32 %v397, %v407
    %411 = vrot.lane.b32.xlu0 %v409, 64
    %v412 = vpop.permute.xlu0 %411
    %v414 = vadd.f32 %v404, %v412
    %v415 = vtanh.pop %v414
    %417 = vrot.lane.b32.xlu0 %v415, 64
    %v418 = vpop.permute.xlu0 %417
    %v420 = vmul.f32 %v399, %v418
    %v421 = vld [vmem:[#allocation2] sm:$0xc0]
    %v422 = vld [vmem:[#allocation2 + $0x8] sm:$0xc0]
    %v423 = vpack.c.bf16 %v420, %v420
    %v425 = vrot.slane %v423, 2
    %v427 = vsel %vm166, %v425, 0
    %429 = vmatprep.subr.bf16.mxu0 %v151
    %430 = vmatpush1.bf16.msra.mxu0 %v150
    %431 = vmatprep.subr.bf16.mxu0 %v153
    %432 = vmatpush1.bf16.msra.mxu0 %v152
    %433 = vmatprep.subr.bf16.mxu0 %v155
    %434 = vmatpush1.bf16.msra.mxu0 %v154
    %435 = vmatprep.subr.bf16.mxu0 %v157
    %436 = vmatpush1.bf16.msra.mxu0 %v156
    %437 = vmatprep.subr.bf16.mxu0 0
    %438 = vmatpush1.bf16.msra.mxu0 0
    %439 = vmatprep.subr.bf16.mxu0 0
    %440 = vmatpush1.bf16.msra.mxu0 0
    %441 = vmatprep.subr.bf16.mxu0 0
    %442 = vmatpush1.bf16.msra.mxu0 0
    %443 = vmatprep.subr.bf16.mxu0 0
    %444 = vmatpush1.bf16.msra.mxu0 0
    %445 = vmatprep.subr.bf16.mxu0 0
    %446 = vmatpush1.bf16.msra.mxu0 0
    %447 = vmatprep.subr.bf16.mxu0 0
    %448 = vmatpush1.bf16.msra.mxu0 0
    %449 = vmatprep.subr.bf16.mxu0 0
    %450 = vmatpush1.bf16.msra.mxu0 0
    %451 = vmatprep.subr.bf16.mxu0 0
    %452 = vmatpush1.bf16.msra.mxu0 0
    %453 = vmatprep.subr.bf16.mxu0 0
    %454 = vmatpush1.bf16.msra.mxu0 0
    %455 = vmatprep.subr.bf16.mxu0 0
    %456 = vmatpush1.bf16.msra.mxu0 0
    %457 = vmatprep.subr.bf16.mxu0 0
    %458 = vmatpush1.bf16.msra.mxu0 0
    %459 = vmatprep.subr.bf16.mxu0 0
    %460 = vmatpush1.bf16.msra.mxu0 0
    %461 = vmatprep.mubr.bf16.mxu0 0
    %462 = vmatmul.mubr.bf16.gmra.mrb[0].mxu0 %v427
    %v463 = vpop.f32.mrb[0].mxu0
    %v464 = vadd.f32 0.0, %v463
    %v465 = vpop.f32.mrb[0].mxu0
    %v466 = vadd.f32 0.0, %v465
    %v467 = vpop.f32.mrb[0].mxu0
    %v468 = vpop.f32.mrb[0].mxu0
    %469 = vdwg.mxu0
    %v472 = vrot.slane %v464, 2
    %v473 = vrot.slane %v466, 2
    %v476 = vadd.f32 %v421, %v472
    %v477 = vadd.f32 %v422, %v473
    %v478 = vxor.u32 %v476, 2147483648
    %v479 = vxor.u32 %v477, 2147483648
    %v480 = vmul.f32 %v478, 1.442695
    %v481 = vpow.pop %v480
    %v482 = vmul.f32 %v479, 1.442695
    %v483 = vpow.pop %v482
    %v484 = vadd.f32 %v481, 1.0
    %v485 = vadd.f32 %v483, 1.0
    %v486 = vrcp.pop %v484
    %v487 = vmul.f32 1.0, %v486
    %v488 = vrcp.pop %v485
    %v489 = vmul.f32 1.0, %v488
    %v490 = vtanh.pop %v477
    %v492 = vrot.slane %v414, 6
    %v494 = vmul.f32 %v487, %v492
    %496 = vrot.lane.b32.xlu0 %v490, 64
    %v497 = vpop.permute.xlu0 %496
    %v499 = vmul.f32 %v487, %v497
    %501 = vrot.lane.b32.xlu0 %v499, 64
    %v502 = vpop.permute.xlu0 %501
    %v504 = vadd.f32 %v494, %v502
    %v505 = vtanh.pop %v504
    %507 = vrot.lane.b32.xlu0 %v505, 64
    %v508 = vpop.permute.xlu0 %507
    %v510 = vmul.f32 %v489, %v508
    %v511 = vld [vmem:[#allocation2 + $0x10] sm:$0x3]
    %v512 = vld [vmem:[#allocation2 + $0x18] sm:$0x3]
    %v513 = vpack.c.bf16 %v510, %v510
    %v515 = vrot.slane %v513, 3
    %v517 = vsel %vm166, %v515, 0
    %519 = vmatprep.subr.bf16.mxu0 %v151
    %520 = vmatpush1.bf16.msra.mxu0 %v150
    %521 = vmatprep.subr.bf16.mxu0 %v153
    %522 = vmatpush1.bf16.msra.mxu0 %v152
    %523 = vmatprep.subr.bf16.mxu0 %v155
    %524 = vmatpush1.bf16.msra.mxu0 %v154
    %525 = vmatprep.subr.bf16.mxu0 %v157
    %526 = vmatpush1.bf16.msra.mxu0 %v156
    %527 = vmatprep.subr.bf16.mxu0 0
    %528 = vmatpush1.bf16.msra.mxu0 0
    %529 = vmatprep.subr.bf16.mxu0 0
    %530 = vmatpush1.bf16.msra.mxu0 0
    %531 = vmatprep.subr.bf16.mxu0 0
    %532 = vmatpush1.bf16.msra.mxu0 0
    %533 = vmatprep.subr.bf16.mxu0 0
    %534 = vmatpush1.bf16.msra.mxu0 0
    %535 = vmatprep.subr.bf16.mxu0 0
    %536 = vmatpush1.bf16.msra.mxu0 0
    %537 = vmatprep.subr.bf16.mxu0 0
    %538 = vmatpush1.bf16.msra.mxu0 0
    %539 = vmatprep.subr.bf16.mxu0 0
    %540 = vmatpush1.bf16.msra.mxu0 0
    %541 = vmatprep.subr.bf16.mxu0 0
    %542 = vmatpush1.bf16.msra.mxu0 0
    %543 = vmatprep.subr.bf16.mxu0 0
    %544 = vmatpush1.bf16.msra.mxu0 0
    %545 = vmatprep.subr.bf16.mxu0 0
    %546 = vmatpush1.bf16.msra.mxu0 0
    %547 = vmatprep.subr.bf16.mxu0 0
    %548 = vmatpush1.bf16.msra.mxu0 0
    %549 = vmatprep.subr.bf16.mxu0 0
    %550 = vmatpush1.bf16.msra.mxu0 0
    %551 = vmatprep.mubr.bf16.mxu0 0
    %552 = vmatmul.mubr.bf16.gmra.mrb[0].mxu0 %v517
    %v553 = vpop.f32.mrb[0].mxu0
    %v554 = vadd.f32 0.0, %v553
    %v555 = vpop.f32.mrb[0].mxu0
    %v556 = vadd.f32 0.0, %v555
    %v557 = vpop.f32.mrb[0].mxu0
    %v558 = vpop.f32.mrb[0].mxu0
    %559 = vdwg.mxu0
    %v560 = vadd.f32 %v511, %v554
    %v561 = vadd.f32 %v512, %v556
    %v562 = vxor.u32 %v560, 2147483648
    %v563 = vxor.u32 %v561, 2147483648
    %v564 = vmul.f32 %v562, 1.442695
    %v565 = vpow.pop %v564
    %v566 = vmul.f32 %v563, 1.442695
    %v567 = vpow.pop %v566
    %v568 = vadd.f32 %v565, 1.0
    %v569 = vadd.f32 %v567, 1.0
    %v570 = vrcp.pop %v568
    %v571 = vmul.f32 1.0, %v570
    %v572 = vrcp.pop %v569
    %v573 = vmul.f32 1.0, %v572
    %v574 = vtanh.pop %v561
    %v576 = vrot.slane %v504, 6
    %v578 = vmul.f32 %v571, %v576
    %580 = vrot.lane.b32.xlu0 %v574, 64
    %v581 = vpop.permute.xlu0 %580
    %v583 = vmul.f32 %v571, %v581
    %585 = vrot.lane.b32.xlu0 %v583, 64
    %v586 = vpop.permute.xlu0 %585
    %v588 = vadd.f32 %v578, %v586
    %v589 = vtanh.pop %v588
    %591 = vrot.lane.b32.xlu0 %v589, 64
    %v592 = vpop.permute.xlu0 %591
    %v594 = vmul.f32 %v573, %v592
    %v595 = vld [vmem:[#allocation2 + $0x10] sm:$0xc]
    %v596 = vld [vmem:[#allocation2 + $0x18] sm:$0xc]
    %v597 = vpack.c.bf16 %v594, %v594
    %v599 = vsel %vm166, %v597, 0
    %601 = vmatprep.subr.bf16.mxu0 %v151
    %602 = vmatpush1.bf16.msra.mxu0 %v150
    %603 = vmatprep.subr.bf16.mxu0 %v153
    %604 = vmatpush1.bf16.msra.mxu0 %v152
    %605 = vmatprep.subr.bf16.mxu0 %v155
    %606 = vmatpush1.bf16.msra.mxu0 %v154
    %607 = vmatprep.subr.bf16.mxu0 %v157
    %608 = vmatpush1.bf16.msra.mxu0 %v156
    %609 = vmatprep.subr.bf16.mxu0 0
    %610 = vmatpush1.bf16.msra.mxu0 0
    %611 = vmatprep.subr.bf16.mxu0 0
    %612 = vmatpush1.bf16.msra.mxu0 0
    %613 = vmatprep.subr.bf16.mxu0 0
    %614 = vmatpush1.bf16.msra.mxu0 0
    %615 = vmatprep.subr.bf16.mxu0 0
    %616 = vmatpush1.bf16.msra.mxu0 0
    %617 = vmatprep.subr.bf16.mxu0 0
    %618 = vmatpush1.bf16.msra.mxu0 0
    %619 = vmatprep.subr.bf16.mxu0 0
    %620 = vmatpush1.bf16.msra.mxu0 0
    %621 = vmatprep.subr.bf16.mxu0 0
    %622 = vmatpush1.bf16.msra.mxu0 0
    %623 = vmatprep.subr.bf16.mxu0 0
    %624 = vmatpush1.bf16.msra.mxu0 0
    %625 = vmatprep.subr.bf16.mxu0 0
    %626 = vmatpush1.bf16.msra.mxu0 0
    %627 = vmatprep.subr.bf16.mxu0 0
    %628 = vmatpush1.bf16.msra.mxu0 0
    %629 = vmatprep.subr.bf16.mxu0 0
    %630 = vmatpush1.bf16.msra.mxu0 0
    %631 = vmatprep.subr.bf16.mxu0 0
    %632 = vmatpush1.bf16.msra.mxu0 0
    %633 = vmatprep.mubr.bf16.mxu0 0
    %634 = vmatmul.mubr.bf16.gmra.mrb[0].mxu0 %v599
    %v635 = vpop.f32.mrb[0].mxu0
    %v636 = vadd.f32 0.0, %v635
    %v637 = vpop.f32.mrb[0].mxu0
    %v638 = vadd.f32 0.0, %v637
    %v639 = vpop.f32.mrb[0].mxu0
    %v640 = vpop.f32.mrb[0].mxu0
    %641 = vdwg.mxu0
    %v644 = vrot.slane %v636, 6
    %v645 = vrot.slane %v638, 6
    %v648 = vadd.f32 %v595, %v644
    %v649 = vadd.f32 %v596, %v645
    %v650 = vxor.u32 %v648, 2147483648
    %v651 = vxor.u32 %v649, 2147483648
    %v652 = vmul.f32 %v650, 1.442695
    %v653 = vpow.pop %v652
    %v654 = vmul.f32 %v651, 1.442695
    %v655 = vpow.pop %v654
    %v656 = vadd.f32 %v653, 1.0
    %v657 = vadd.f32 %v655, 1.0
    %v658 = vrcp.pop %v656
    %v659 = vmul.f32 1.0, %v658
    %v660 = vrcp.pop %v657
    %v661 = vmul.f32 1.0, %v660
    %v662 = vtanh.pop %v649
    %v664 = vrot.slane %v588, 6
    %v666 = vmul.f32 %v659, %v664
    %668 = vrot.lane.b32.xlu0 %v662, 64
    %v669 = vpop.permute.xlu0 %668
    %v671 = vmul.f32 %v659, %v669
    %673 = vrot.lane.b32.xlu0 %v671, 64
    %v674 = vpop.permute.xlu0 %673
    %v676 = vadd.f32 %v666, %v674
    %v677 = vtanh.pop %v676
    %679 = vrot.lane.b32.xlu0 %v677, 64
    %v680 = vpop.permute.xlu0 %679
    %v682 = vmul.f32 %v661, %v680
    %v683 = vld [vmem:[#allocation2 + $0x10] sm:$0x30]
    %v684 = vld [vmem:[#allocation2 + $0x18] sm:$0x30]
    %v685 = vpack.c.bf16 %v682, %v682
    %v687 = vrot.slane %v685, 1
    %v689 = vsel %vm166, %v687, 0
    %691 = vmatprep.subr.bf16.mxu0 %v151
    %692 = vmatpush1.bf16.msra.mxu0 %v150
    %693 = vmatprep.subr.bf16.mxu0 %v153
    %694 = vmatpush1.bf16.msra.mxu0 %v152
    %695 = vmatprep.subr.bf16.mxu0 %v155
    %696 = vmatpush1.bf16.msra.mxu0 %v154
    %697 = vmatprep.subr.bf16.mxu0 %v157
    %698 = vmatpush1.bf16.msra.mxu0 %v156
    %699 = vmatprep.subr.bf16.mxu0 0
    %700 = vmatpush1.bf16.msra.mxu0 0
    %701 = vmatprep.subr.bf16.mxu0 0
    %702 = vmatpush1.bf16.msra.mxu0 0
    %703 = vmatprep.subr.bf16.mxu0 0
    %704 = vmatpush1.bf16.msra.mxu0 0
    %705 = vmatprep.subr.bf16.mxu0 0
    %706 = vmatpush1.bf16.msra.mxu0 0
    %707 = vmatprep.subr.bf16.mxu0 0
    %708 = vmatpush1.bf16.msra.mxu0 0
    %709 = vmatprep.subr.bf16.mxu0 0
    %710 = vmatpush1.bf16.msra.mxu0 0
    %711 = vmatprep.subr.bf16.mxu0 0
    %712 = vmatpush1.bf16.msra.mxu0 0
    %713 = vmatprep.subr.bf16.mxu0 0
    %714 = vmatpush1.bf16.msra.mxu0 0
    %715 = vmatprep.subr.bf16.mxu0 0
    %716 = vmatpush1.bf16.msra.mxu0 0
    %717 = vmatprep.subr.bf16.mxu0 0
    %718 = vmatpush1.bf16.msra.mxu0 0
    %719 = vmatprep.subr.bf16.mxu0 0
    %720 = vmatpush1.bf16.msra.mxu0 0
    %721 = vmatprep.subr.bf16.mxu0 0
    %722 = vmatpush1.bf16.msra.mxu0 0
    %723 = vmatprep.mubr.bf16.mxu0 0
    %724 = vmatmul.mubr.bf16.gmra.mrb[0].mxu0 %v689
    %v725 = vpop.f32.mrb[0].mxu0
    %v726 = vadd.f32 0.0, %v725
    %v727 = vpop.f32.mrb[0].mxu0
    %v728 = vadd.f32 0.0, %v727
    %v729 = vpop.f32.mrb[0].mxu0
    %v730 = vpop.f32.mrb[0].mxu0
    %731 = vdwg.mxu0
    %v734 = vrot.slane %v726, 4
    %v735 = vrot.slane %v728, 4
    %v738 = vadd.f32 %v683, %v734
    %v739 = vadd.f32 %v684, %v735
    %v740 = vxor.u32 %v738, 2147483648
    %v741 = vxor.u32 %v739, 2147483648
    %v742 = vmul.f32 %v740, 1.442695
    %v743 = vpow.pop %v742
    %v744 = vmul.f32 %v741, 1.442695
    %v745 = vpow.pop %v744
    %v746 = vadd.f32 %v743, 1.0
    %v747 = vadd.f32 %v745, 1.0
    %v748 = vrcp.pop %v746
    %v749 = vmul.f32 1.0, %v748
    %v750 = vrcp.pop %v747
    %v751 = vmul.f32 1.0, %v750
    %v752 = vtanh.pop %v739
    %v754 = vrot.slane %v676, 6
    %v756 = vmul.f32 %v749, %v754
    %758 = vrot.lane.b32.xlu0 %v752, 64
    %v759 = vpop.permute.xlu0 %758
    %v761 = vmul.f32 %v749, %v759
    %763 = vrot.lane.b32.xlu0 %v761, 64
    %v764 = vpop.permute.xlu0 %763
    %v766 = vadd.f32 %v756, %v764
    %v767 = vtanh.pop %v766
    %769 = vrot.lane.b32.xlu0 %v767, 64
    %v770 = vpop.permute.xlu0 %769
    %v772 = vmul.f32 %v751, %v770
    %v773 = vld [vmem:[#allocation2 + $0x10] sm:$0xc0]
    %v774 = vld [vmem:[#allocation2 + $0x18] sm:$0xc0]
    %v775 = vpack.c.bf16 %v772, %v772
    %v777 = vrot.slane %v775, 2
    %v779 = vsel %vm166, %v777, 0
    %781 = vmatprep.subr.bf16.mxu0 %v151
    %782 = vmatpush1.bf16.msra.mxu0 %v150
    %783 = vmatprep.subr.bf16.mxu0 %v153
    %784 = vmatpush1.bf16.msra.mxu0 %v152
    %785 = vmatprep.subr.bf16.mxu0 %v155
    %786 = vmatpush1.bf16.msra.mxu0 %v154
    %787 = vmatprep.subr.bf16.mxu0 %v157
    %788 = vmatpush1.bf16.msra.mxu0 %v156
    %789 = vmatprep.subr.bf16.mxu0 0
    %790 = vmatpush1.bf16.msra.mxu0 0
    %791 = vmatprep.subr.bf16.mxu0 0
    %792 = vmatpush1.bf16.msra.mxu0 0
    %793 = vmatprep.subr.bf16.mxu0 0
    %794 = vmatpush1.bf16.msra.mxu0 0
    %795 = vmatprep.subr.bf16.mxu0 0
    %796 = vmatpush1.bf16.msra.mxu0 0
    %797 = vmatprep.subr.bf16.mxu0 0
    %798 = vmatpush1.bf16.msra.mxu0 0
    %799 = vmatprep.subr.bf16.mxu0 0
    %800 = vmatpush1.bf16.msra.mxu0 0
    %801 = vmatprep.subr.bf16.mxu0 0
    %802 = vmatpush1.bf16.msra.mxu0 0
    %803 = vmatprep.subr.bf16.mxu0 0
    %804 = vmatpush1.bf16.msra.mxu0 0
    %805 = vmatprep.subr.bf16.mxu0 0
    %806 = vmatpush1.bf16.msra.mxu0 0
    %807 = vmatprep.subr.bf16.mxu0 0
    %808 = vmatpush1.bf16.msra.mxu0 0
    %809 = vmatprep.subr.bf16.mxu0 0
    %810 = vmatpush1.bf16.msra.mxu0 0
    %811 = vmatprep.subr.bf16.mxu0 0
    %812 = vmatpush1.bf16.msra.mxu0 0
    %813 = vmatprep.mubr.bf16.mxu0 0
    %814 = vmatmul.mubr.bf16.gmra.mrb[0].mxu0 %v779
    %v815 = vpop.f32.mrb[0].mxu0
    %v816 = vadd.f32 0.0, %v815
    %v817 = vpop.f32.mrb[0].mxu0
    %v818 = vadd.f32 0.0, %v817
    %v819 = vpop.f32.mrb[0].mxu0
    %v820 = vpop.f32.mrb[0].mxu0
    %821 = vdwg.mxu0
    %v824 = vrot.slane %v816, 2
    %v825 = vrot.slane %v818, 2
    %v828 = vadd.f32 %v773, %v824
    %v829 = vadd.f32 %v774, %v825
    %v830 = vxor.u32 %v828, 2147483648
    %v831 = vxor.u32 %v829, 2147483648
    %v832 = vmul.f32 %v830, 1.442695
    %v833 = vpow.pop %v832
    %v834 = vmul.f32 %v831, 1.442695
    %v835 = vpow.pop %v834
    %v836 = vadd.f32 %v833, 1.0
    %v837 = vadd.f32 %v835, 1.0
    %v838 = vrcp.pop %v836
    %v839 = vmul.f32 1.0, %v838
    %v840 = vrcp.pop %v837
    %v841 = vmul.f32 1.0, %v840
    %v842 = vtanh.pop %v829
    %v844 = vrot.slane %v766, 6
    %v846 = vmul.f32 %v839, %v844
    %848 = vrot.lane.b32.xlu0 %v842, 64
    %v849 = vpop.permute.xlu0 %848
    %v851 = vmul.f32 %v839, %v849
    %853 = vrot.lane.b32.xlu0 %v851, 64
    %v854 = vpop.permute.xlu0 %853
    %v856 = vadd.f32 %v846, %v854
    %v857 = vtanh.pop %v856
    %859 = vrot.lane.b32.xlu0 %v857, 64
    %v860 = vpop.permute.xlu0 %859
    %v862 = vmul.f32 %v841, %v860
    %v864 = vrot.slane %v330, 2
    %865 = vrot.lane.b32.xlu0 %v864, 64
    %v866 = vpop.permute.xlu0 %865
    %v869 = vrot.slane %v420, 4
    %v872 = vrot.slane %v510, 6
    %873 = vrot.lane.b32.xlu0 %v872, 64
    %v874 = vpop.permute.xlu0 %873
    %v877 = vrot.slane %v682, 2
    %878 = vrot.lane.b32.xlu0 %v877, 64
    %v879 = vpop.permute.xlu0 %878
    %v882 = vrot.slane %v772, 4
    %v885 = vrot.slane %v862, 6
    %886 = vrot.lane.b32.xlu0 %v885, 64
    %v887 = vpop.permute.xlu0 %886
    %v889 = vsel %vm166, %v242, %v866
    %v890 = vsel %vm166, %v869, %v874
    %v891 = vsel %vm166, %v594, %v879
    %v892 = vsel %vm166, %v882, %v887
    %v893 = vpack.c.bf16 %v889, %v889
    %v894 = vpack.c.bf16 %v890, %v890
    %v895 = vpack.c.bf16 %v891, %v891
    %v896 = vpack.c.bf16 %v892, %v892
    %v897 = vld [vmem:[%s4] sm:$0xf]
    %v898 = vld [vmem:[%s4 + $0x4] sm:$0xf]
    %v899 = vld [vmem:[%s4 + $0x8] sm:$0xf]
    %v900 = vld [vmem:[%s4 + $0xc] sm:$0xf]
    %v901 = vld [vmem:[%s4 + $0x10] sm:$0xf]
    %v902 = vld [vmem:[%s4 + $0x14] sm:$0xf]
    %v903 = vld [vmem:[%s4 + $0x18] sm:$0xf]
    %v904 = vld [vmem:[%s4 + $0x1c] sm:$0xf]
    %v905 = vld [vmem:[%s4 + $0x20] sm:$0xf]
    %v906 = vld [vmem:[%s4 + $0x24] sm:$0xf]
    %v907 = vld [vmem:[%s4 + $0x28] sm:$0xf]
    %v908 = vld [vmem:[%s4 + $0x2c] sm:$0xf]
    %v909 = vld [vmem:[%s4 + $0x30] sm:$0xf]
    %v910 = vld [vmem:[%s4 + $0x34] sm:$0xf]
    %v911 = vld [vmem:[%s4 + $0x38] sm:$0xf]
    %v912 = vld [vmem:[%s4 + $0x3c] sm:$0xf]
    %v913 = vld [vmem:[%s4 + $0x40] sm:$0xf]
    %v914 = vld [vmem:[%s4 + $0x44] sm:$0xf]
    %v915 = vld [vmem:[%s4 + $0x48] sm:$0xf]
    %v916 = vld [vmem:[%s4 + $0x4c] sm:$0xf]
    %v917 = vld [vmem:[%s4 + $0x50] sm:$0xf]
    %v918 = vld [vmem:[%s4 + $0x54] sm:$0xf]
    %v919 = vld [vmem:[%s4 + $0x58] sm:$0xf]
    %v920 = vld [vmem:[%s4 + $0x5c] sm:$0xf]
    %v921 = vld [vmem:[%s4 + $0x60] sm:$0xf]
    %v922 = vld [vmem:[%s4 + $0x64] sm:$0xf]
    %v923 = vld [vmem:[%s4 + $0x68] sm:$0xf]
    %v924 = vld [vmem:[%s4 + $0x6c] sm:$0xf]
    %v925 = vld [vmem:[%s4 + $0x70] sm:$0xf]
    %v926 = vld [vmem:[%s4 + $0x74] sm:$0xf]
    %v927 = vld [vmem:[%s4 + $0x78] sm:$0xf]
    %v928 = vld [vmem:[%s4 + $0x7c] sm:$0xf]
    %v929 = vld [vmem:[%s4 + $0x80] sm:$0xf]
    %v930 = vld [vmem:[%s4 + $0x84] sm:$0xf]
    %v931 = vld [vmem:[%s4 + $0x88] sm:$0xf]
    %v932 = vld [vmem:[%s4 + $0x8c] sm:$0xf]
    %v933 = vld [vmem:[%s4 + $0x90] sm:$0xf]
    %v934 = vld [vmem:[%s4 + $0x94] sm:$0xf]
    %v935 = vld [vmem:[%s4 + $0x98] sm:$0xf]
    %v936 = vld [vmem:[%s4 + $0x9c] sm:$0xf]
    %v937 = vld [vmem:[%s4 + $0xa0] sm:$0xf]
    %v938 = vld [vmem:[%s4 + $0xa4] sm:$0xf]
    %v939 = vld [vmem:[%s4 + $0xa8] sm:$0xf]
    %v940 = vld [vmem:[%s4 + $0xac] sm:$0xf]
    %v941 = vld [vmem:[%s4 + $0xb0] sm:$0xf]
    %v942 = vld [vmem:[%s4 + $0xb4] sm:$0xf]
    %v943 = vld [vmem:[%s4 + $0xb8] sm:$0xf]
    %v944 = vld [vmem:[%s4 + $0xbc] sm:$0xf]
    %v945 = vld [vmem:[%s4 + $0xc0] sm:$0xf]
    %v946 = vld [vmem:[%s4 + $0xc4] sm:$0xf]
    %v947 = vld [vmem:[%s4 + $0xc8] sm:$0xf]
    %v948 = vld [vmem:[%s4 + $0xcc] sm:$0xf]
    %v949 = vld [vmem:[%s4 + $0xd0] sm:$0xf]
    %v950 = vld [vmem:[%s4 + $0xd4] sm:$0xf]
    %v951 = vld [vmem:[%s4 + $0xd8] sm:$0xf]
    %v952 = vld [vmem:[%s4 + $0xdc] sm:$0xf]
    %v953 = vld [vmem:[%s4 + $0xe0] sm:$0xf]
    %v954 = vld [vmem:[%s4 + $0xe4] sm:$0xf]
    %v955 = vld [vmem:[%s4 + $0xe8] sm:$0xf]
    %v956 = vld [vmem:[%s4 + $0xec] sm:$0xf]
    %v957 = vld [vmem:[%s4 + $0xf0] sm:$0xf]
    %v958 = vld [vmem:[%s4 + $0xf4] sm:$0xf]
    %v959 = vld [vmem:[%s4 + $0xf8] sm:$0xf]
    %v960 = vld [vmem:[%s4 + $0xfc] sm:$0xf]
    %v1025 = vunpack.c.l.b16 %v897
    %v1026 = vunpack.c.l.b16 %v898
    %v1027 = vunpack.c.l.b16 %v899
    %v1028 = vunpack.c.l.b16 %v900
    %v1029 = vunpack.c.l.b16 %v901
    %v1030 = vunpack.c.l.b16 %v902
    %v1031 = vunpack.c.l.b16 %v903
    %v1032 = vunpack.c.l.b16 %v904
    %v1033 = vunpack.c.l.b16 %v905
    %v1034 = vunpack.c.l.b16 %v906
    %v1035 = vunpack.c.l.b16 %v907
    %v1036 = vunpack.c.l.b16 %v908
    %v1037 = vunpack.c.l.b16 %v909
    %v1038 = vunpack.c.l.b16 %v910
    %v1039 = vunpack.c.l.b16 %v911
    %v1040 = vunpack.c.l.b16 %v912
    %v1041 = vunpack.c.l.b16 %v913
    %v1042 = vunpack.c.l.b16 %v914
    %v1043 = vunpack.c.l.b16 %v915
    %v1044 = vunpack.c.l.b16 %v916
    %v1045 = vunpack.c.l.b16 %v917
    %v1046 = vunpack.c.l.b16 %v918
    %v1047 = vunpack.c.l.b16 %v919
    %v1048 = vunpack.c.l.b16 %v920
    %v1049 = vunpack.c.l.b16 %v921
    %v1050 = vunpack.c.l.b16 %v922
    %v1051 = vunpack.c.l.b16 %v923
    %v1052 = vunpack.c.l.b16 %v924
    %v1053 = vunpack.c.l.b16 %v925
    %v1054 = vunpack.c.l.b16 %v926
    %v1055 = vunpack.c.l.b16 %v927
    %v1056 = vunpack.c.l.b16 %v928
    %v1057 = vunpack.c.l.b16 %v929
    %v1058 = vunpack.c.l.b16 %v930
    %v1059 = vunpack.c.l.b16 %v931
    %v1060 = vunpack.c.l.b16 %v932
    %v1061 = vunpack.c.l.b16 %v933
    %v1062 = vunpack.c.l.b16 %v934
    %v1063 = vunpack.c.l.b16 %v935
    %v1064 = vunpack.c.l.b16 %v936
    %v1065 = vunpack.c.l.b16 %v937
    %v1066 = vunpack.c.l.b16 %v938
    %v1067 = vunpack.c.l.b16 %v939
    %v1068 = vunpack.c.l.b16 %v940
    %v1069 = vunpack.c.l.b16 %v941
    %v1070 = vunpack.c.l.b16 %v942
    %v1071 = vunpack.c.l.b16 %v943
    %v1072 = vunpack.c.l.b16 %v944
    %v1073 = vunpack.c.l.b16 %v945
    %v1074 = vunpack.c.l.b16 %v946
    %v1075 = vunpack.c.l.b16 %v947
    %v1076 = vunpack.c.l.b16 %v948
    %v1077 = vunpack.c.l.b16 %v949
    %v1078 = vunpack.c.l.b16 %v950
    %v1079 = vunpack.c.l.b16 %v951
    %v1080 = vunpack.c.l.b16 %v952
    %v1081 = vunpack.c.l.b16 %v953
    %v1082 = vunpack.c.l.b16 %v954
    %v1083 = vunpack.c.l.b16 %v955
    %v1084 = vunpack.c.l.b16 %v956
    %v1085 = vunpack.c.l.b16 %v957
    %v1086 = vunpack.c.l.b16 %v958
    %v1087 = vunpack.c.l.b16 %v959
    %v1088 = vunpack.c.l.b16 %v960
    %v1089 = vpack.c.b16 %v1026, %v1025
    %v1090 = vpack.c.b16 %v1028, %v1027
    %v1091 = vpack.c.b16 %v1030, %v1029
    %v1092 = vpack.c.b16 %v1032, %v1031
    %v1093 = vpack.c.b16 %v1034, %v1033
    %v1094 = vpack.c.b16 %v1036, %v1035
    %v1095 = vpack.c.b16 %v1038, %v1037
    %v1096 = vpack.c.b16 %v1040, %v1039
    %v1097 = vpack.c.b16 %v1042, %v1041
    %v1098 = vpack.c.b16 %v1044, %v1043
    %v1099 = vpack.c.b16 %v1046, %v1045
    %v1100 = vpack.c.b16 %v1048, %v1047
    %v1101 = vpack.c.b16 %v1050, %v1049
    %v1102 = vpack.c.b16 %v1052, %v1051
    %v1103 = vpack.c.b16 %v1054, %v1053
    %v1104 = vpack.c.b16 %v1056, %v1055
    %v1105 = vpack.c.b16 %v1058, %v1057
    %v1106 = vpack.c.b16 %v1060, %v1059
    %v1107 = vpack.c.b16 %v1062, %v1061
    %v1108 = vpack.c.b16 %v1064, %v1063
    %v1109 = vpack.c.b16 %v1066, %v1065
    %v1110 = vpack.c.b16 %v1068, %v1067
    %v1111 = vpack.c.b16 %v1070, %v1069
    %v1112 = vpack.c.b16 %v1072, %v1071
    %v1113 = vpack.c.b16 %v1074, %v1073
    %v1114 = vpack.c.b16 %v1076, %v1075
    %v1115 = vpack.c.b16 %v1078, %v1077
    %v1116 = vpack.c.b16 %v1080, %v1079
    %v1117 = vpack.c.b16 %v1082, %v1081
    %v1118 = vpack.c.b16 %v1084, %v1083
    %v1119 = vpack.c.b16 %v1086, %v1085
    %v1120 = vpack.c.b16 %v1088, %v1087
    %1153 = vmatprep.subr.bf16.mxu0 0
    %1154 = vmatpush1.bf16.msra.mxu0 %v1089
    %1155 = vmatprep.subr.bf16.mxu0 0
    %1156 = vmatpush1.bf16.msra.mxu0 %v1090
    %1157 = vmatprep.subr.bf16.mxu0 0
    %1158 = vmatpush1.bf16.msra.mxu0 %v1091
    %1159 = vmatprep.subr.bf16.mxu0 0
    %1160 = vmatpush1.bf16.msra.mxu0 %v1092
    %1161 = vmatprep.subr.bf16.mxu0 0
    %1162 = vmatpush1.bf16.msra.mxu0 %v1093
    %1163 = vmatprep.subr.bf16.mxu0 0
    %1164 = vmatpush1.bf16.msra.mxu0 %v1094
    %1165 = vmatprep.subr.bf16.mxu0 0
    %1166 = vmatpush1.bf16.msra.mxu0 %v1095
    %1167 = vmatprep.subr.bf16.mxu0 0
    %1168 = vmatpush1.bf16.msra.mxu0 %v1096
    %1169 = vmatprep.subr.bf16.mxu0 0
    %1170 = vmatpush1.bf16.msra.mxu0 %v1097
    %1171 = vmatprep.subr.bf16.mxu0 0
    %1172 = vmatpush1.bf16.msra.mxu0 %v1098
    %1173 = vmatprep.subr.bf16.mxu0 0
    %1174 = vmatpush1.bf16.msra.mxu0 %v1099
    %1175 = vmatprep.subr.bf16.mxu0 0
    %1176 = vmatpush1.bf16.msra.mxu0 %v1100
    %1177 = vmatprep.subr.bf16.mxu0 0
    %1178 = vmatpush1.bf16.msra.mxu0 %v1101
    %1179 = vmatprep.subr.bf16.mxu0 0
    %1180 = vmatpush1.bf16.msra.mxu0 %v1102
    %1181 = vmatprep.subr.bf16.mxu0 0
    %1182 = vmatpush1.bf16.msra.mxu0 %v1103
    %1183 = vmatprep.subr.bf16.mxu0 0
    %1184 = vmatpush1.bf16.msra.mxu0 %v1104
    %1185 = vmatprep.mubr.bf16.mxu0 %v894
    %1186 = vmatmul.mubr.bf16.gmra.mrb[0].mxu0 %v893
    %v1187 = vpop.f32.mrb[0].mxu0
    %v1188 = vadd.f32 0.0, %v1187
    %v1189 = vpop.f32.mrb[0].mxu0
    %v1190 = vpop.f32.mrb[0].mxu0
    %v1191 = vpop.f32.mrb[0].mxu0
    %1192 = vdwg.mxu0
    %1193 = vmatprep.subr.bf16.mxu0 0
    %1194 = vmatpush1.bf16.msra.mxu0 %v1105
    %1195 = vmatprep.subr.bf16.mxu0 0
    %1196 = vmatpush1.bf16.msra.mxu0 %v1106
    %1197 = vmatprep.subr.bf16.mxu0 0
    %1198 = vmatpush1.bf16.msra.mxu0 %v1107
    %1199 = vmatprep.subr.bf16.mxu0 0
    %1200 = vmatpush1.bf16.msra.mxu0 %v1108
    %1201 = vmatprep.subr.bf16.mxu0 0
    %1202 = vmatpush1.bf16.msra.mxu0 %v1109
    %1203 = vmatprep.subr.bf16.mxu0 0
    %1204 = vmatpush1.bf16.msra.mxu0 %v1110
    %1205 = vmatprep.subr.bf16.mxu0 0
    %1206 = vmatpush1.bf16.msra.mxu0 %v1111
    %1207 = vmatprep.subr.bf16.mxu0 0
    %1208 = vmatpush1.bf16.msra.mxu0 %v1112
    %1209 = vmatprep.subr.bf16.mxu0 0
    %1210 = vmatpush1.bf16.msra.mxu0 %v1113
    %1211 = vmatprep.subr.bf16.mxu0 0
    %1212 = vmatpush1.bf16.msra.mxu0 %v1114
    %1213 = vmatprep.subr.bf16.mxu0 0
    %1214 = vmatpush1.bf16.msra.mxu0 %v1115
    %1215 = vmatprep.subr.bf16.mxu0 0
    %1216 = vmatpush1.bf16.msra.mxu0 %v1116
    %1217 = vmatprep.subr.bf16.mxu0 0
    %1218 = vmatpush1.bf16.msra.mxu0 %v1117
    %1219 = vmatprep.subr.bf16.mxu0 0
    %1220 = vmatpush1.bf16.msra.mxu0 %v1118
    %1221 = vmatprep.subr.bf16.mxu0 0
    %1222 = vmatpush1.bf16.msra.mxu0 %v1119
    %1223 = vmatprep.subr.bf16.mxu0 0
    %1224 = vmatpush1.bf16.msra.mxu0 %v1120
    %1225 = vmatprep.mubr.bf16.mxu0 %v896
    %1226 = vmatmul.mubr.bf16.gmra.mrb[0].mxu0 %v895
    %v1227 = vpop.f32.mrb[0].mxu0
    %v1228 = vadd.f32 %v1188, %v1227
    %v1229 = vpop.f32.mrb[0].mxu0
    %v1230 = vpop.f32.mrb[0].mxu0
    %v1231 = vpop.f32.mrb[0].mxu0
    %1232 = vdwg.mxu0
    %v1233 = vsel %vm166, %v1228, %v887
    %1234 = vst [vmem:[#allocation3] sm:$0x3] %v1233
    // Predicated region
    $region22: #{lstm_rnn_forward.1} parent=1 // pred_check
      _
    $region23: #{lstm_rnn_forward.1} parent=1 // pred_check_branch
      %1236 = sbr.rel (0) target = $region25
    $region24: #{lstm_rnn_forward.1} parent=1 // pred_region
      %s1238 = ssub.s32 32, 32
      %1239 = vsyncadd [#allocation4], %s1238
      %s1241 = sshll.u32 [#allocation3], 4
      %s1242 = int_to_ptr.vmem [resolvable:$true] %s1241
      %1244 = dma.vmem_to_hbm [thread:$0]  %s1242, 32, %s5, [#allocation4]
    $region25: #{lstm_rnn_forward.1} parent=1 // pred_fallthru
      _
    // Predicated region
    $region26: #{lstm_rnn_forward.1} parent=1 // pred_check
      _
    $region27: #{lstm_rnn_forward.1} parent=1 // pred_check_branch
      %1246 = sbr.rel (0) target = $region29
    $region28: #{lstm_rnn_forward.1} parent=1 // pred_region
      %1247 = dma.done [#allocation4], 32
    $region29: #{lstm_rnn_forward.1} parent=1 // pred_fallthru
      _
    %1248 = vsyncpa [#allocation4], 1

</llo_original>
